<compile_context>
chip_gen: v7x
topology: tpu7x:2x2x1
jax: 0.10.0
libtpu: 0.0.40
codegen_flags: <defaults>
</compile_context>

<pallas_src>
from functools import partial

import jax
import jax.numpy as jnp
from jax.experimental import pallas as pl
from jax.experimental.pallas import tpu as pltpu


def _round_up(v, m):
    return ((v + m - 1) // m) * m


# ----------------------------------------------------------------------------
# Padding identical to padding_function in the PyTorch module (ZeroPad2d).
# Torch ZeroPad2d((left, right, top, bottom))  <->  jnp.pad (top,bottom),(left,right)
# ----------------------------------------------------------------------------
def padding_function(x, kernel_size, stride, dilation_rate):
    h, w = x.shape[2], x.shape[3]
    nH = ((h + stride - 1) // stride - 1) * stride + (kernel_size - 1) * dilation_rate + 1
    nW = ((w + stride - 1) // stride - 1) * stride + (kernel_size - 1) * dilation_rate + 1
    top_bottom = nH - h
    left_right = nW - w
    if top_bottom > 0:
        bottom = top_bottom // 2
        top = top_bottom - bottom
    else:
        top = bottom = 0
    if left_right > 0:
        right = left_right // 2
        left = left_right - right
    else:
        left = right = 0
    return jnp.pad(x, ((0, 0), (0, 0), (top, bottom), (left, right)))


# ----------------------------------------------------------------------------
# im2col (plain-JAX glue), batched: (N, K, OH*OW) with K = Cin*kh*kw.
# The reshape after the stack is layout-preserving (row-major bitcast), so no
# physical transpose of the 9x-blown-up matrix is ever executed.
# ----------------------------------------------------------------------------
def im2col_batched(xp, kernel_size, stride, dilation):
    n, c, hp, wp = xp.shape
    oh = (hp - (kernel_size - 1) * dilation - 1) // stride + 1
    ow = (wp - (kernel_size - 1) * dilation - 1) // stride + 1
    slices = []
    for i in range(kernel_size):
        for j in range(kernel_size):
            sl = xp[
                :, :,
                i * dilation: i * dilation + (oh - 1) * stride + 1: stride,
                j * dilation: j * dilation + (ow - 1) * stride + 1: stride,
            ]                                              # (N, C, OH, OW)
            slices.append(sl)
    p = jnp.stack(slices, axis=2)                          # (N, C, kk, OH, OW)
    p = p.reshape(n, c * kernel_size * kernel_size, oh * ow)   # bitcast reshape
    return p, oh, ow


# ----------------------------------------------------------------------------
# Pallas kernels.  Blocks are lane-dense: (1, rows, TM) with TM a multiple of
# 128 (or the full OH*OW).  The gated kernel does a single fused dot for both
# halves; the split of the f32 accumulator happens at an 8-aligned sublane
# offset (ch_pad).
# ----------------------------------------------------------------------------
def _gated_conv_kernel(p_ref, w_ref, b_ref, o_ref, *, ch, ch_pad):
    # p_ref: (1, K, TM)   w_ref: (2*ch_pad, K)   b_ref: (2*ch_pad, 1) f32
    # o_ref: (1, ch, TM)
    p = p_ref[0]                                            # (K, TM)
    acc = jnp.dot(w_ref[...], p, preferred_element_type=jnp.float32) + b_ref[...]
    xa = acc[:ch]                                           # ELU half
    ya = acc[ch_pad:ch_pad + ch]                            # sigmoid half (8-aligned start)
    # ELU(alpha=1); min() keeps the untaken branch finite (no inf in exp).
    x_elu = jnp.where(xa > 0, xa, jnp.exp(jnp.minimum(xa, 0.0)) - 1.0)
    # sigmoid via tanh: one EUP transcendental per element, exact.
    y_sig = 0.5 * (jnp.tanh(0.5 * ya) + 1.0)
    o_ref[0] = (x_elu * y_sig).astype(o_ref.dtype)


def _plain_conv_kernel(p_ref, w_ref, b_ref, o_ref):
    acc = jnp.dot(w_ref[...], p_ref[0], preferred_element_type=jnp.float32)
    o_ref[0] = (acc + b_ref[...]).astype(o_ref.dtype)


# ----------------------------------------------------------------------------
# Generation-aware, byte-based tile selection.
# ----------------------------------------------------------------------------
def _vmem_capacity_bytes():
    try:
        return int(pltpu.get_tpu_info().vmem_capacity_bytes)
    except Exception:
        return 64 * 1024 * 1024  # conservative: v7x per-TensorCore VMEM


_PATCH_TILE_TARGET_BYTES = 4 << 20   # ~4 MiB per patches buffer (8 MiB dbl-buffered)


def _select_row_tile(mimg, n_batch, k_dim, w_rows, out_rows, in_bytes, out_bytes):
    cap = _vmem_capacity_bytes()
    budget = cap // 2                                          # headroom
    fixed = 2 * w_rows * (k_dim * in_bytes + 4)                # weights + bias
    per_col = 2 * (k_dim * in_bytes + out_rows * out_bytes)    # dbl-buffered patch + out column
    tm_vmem = max(per_col, budget - fixed) // per_col
    tm_bytes = _PATCH_TILE_TARGET_BYTES // max(1, k_dim * in_bytes)
    tm = max(128, min(tm_vmem, tm_bytes))
    # Keep >= 4 total grid blocks when the problem allows it, so both v7x
    # TensorCores get >= 2 pipelined grid steps each.
    if n_batch < 4:
        min_mblocks = -(-4 // n_batch)                         # ceil(4 / n_batch)
        tm = min(tm, max(128, _round_up(-(-mimg // min_mblocks), 128)))
    tm = max(128, (tm // 128) * 128)
    if mimg <= tm:
        return mimg                                            # single full block per image
    return tm


# ----------------------------------------------------------------------------
# Wrapper: Gen_Conv forward (NCHW in, NCHW out; matches the PyTorch module).
# ----------------------------------------------------------------------------
def gen_conv_forward(x, weight, bias, *, kernel_size=3, stride=1,
                     dilation_rate=1, use_activation=True,
                     matmul_dtype=jnp.bfloat16, tm=None):
    """x: (N, Cin, H, W); weight: (Cout, Cin, kh, kw); bias: (Cout,)."""
    n, cin, _, _ = x.shape
    cout = weight.shape[0]
    gated = use_activation and (cout != 3)
    k_dim = cin * kernel_size * kernel_size

    in_dtype = x.dtype if matmul_dtype is None else jnp.dtype(matmul_dtype)
    in_bytes = jnp.dtype(in_dtype).itemsize
    out_bytes = jnp.dtype(x.dtype).itemsize

    xp = padding_function(x, kernel_size, stride, dilation_rate)
    # Cast before im2col so the 9x-materialized patch matrix is already small.
    patches, oh, ow = im2col_batched(xp.astype(in_dtype), kernel_size, stride,
                                     dilation_rate)
    mimg = oh * ow

    if gated:
        assert cout % 2 == 0, "gated path requires an even number of output channels"
        ch = cout // 2
        ch_pad = _round_up(ch, 8)        # 8-aligned sublane split of the fused dot
        w_rows, out_rows = 2 * ch_pad, ch
    else:
        ch = ch_pad = None
        w_rows, out_rows = cout, cout

    if tm is None:
        tm = _select_row_tile(mimg, n, k_dim, w_rows, out_rows, in_bytes, out_bytes)
    grid = (n, pl.cdiv(mimg, tm))

    cap = _vmem_capacity_bytes()
    est_bytes = (2 * (k_dim * tm * in_bytes + out_rows * tm * out_bytes)
                 + 2 * w_rows * (k_dim * in_bytes + 4))
    vmem_limit = int(min(3 * cap // 4, max(32 * 1024 * 1024, 2 * est_bytes)))

    cparams = pltpu.CompilerParams(
        dimension_semantics=("parallel", "parallel"),
        vmem_limit_bytes=vmem_limit,
    )

    w2 = weight.reshape(cout, k_dim).astype(jnp.float32)
    b2 = bias.astype(jnp.float32)

    if gated:
        # Pack both halves of the weight into one matrix -> single MXU pass.
        w_packed = jnp.zeros((w_rows, k_dim), jnp.float32)
        w_packed = w_packed.at[:ch].set(w2[:ch]).at[ch_pad:ch_pad + ch].set(w2[ch:])
        b_packed = jnp.zeros((w_rows, 1), jnp.float32)
        b_packed = b_packed.at[:ch, 0].set(b2[:ch]).at[ch_pad:ch_pad + ch, 0].set(b2[ch:])
        w_mm = w_packed.astype(in_dtype)

        out3 = pl.pallas_call(
            partial(_gated_conv_kernel, ch=ch, ch_pad=ch_pad),
            out_shape=jax.ShapeDtypeStruct((n, ch, mimg), x.dtype),
            grid_spec=pltpu.PrefetchScalarGridSpec(
                num_scalar_prefetch=0,
                grid=grid,
                in_specs=[
                    pl.BlockSpec((1, k_dim, tm), lambda b, m: (b, 0, m)),   # patches tile
                    pl.BlockSpec((w_rows, k_dim), lambda b, m: (0, 0)),     # packed weights
                    pl.BlockSpec((w_rows, 1), lambda b, m: (0, 0)),         # packed bias
                ],
                out_specs=pl.BlockSpec((1, ch, tm), lambda b, m: (b, 0, m)),
            ),
            compiler_params=cparams,
        )(patches, w_mm, b_packed)
        out = out3.reshape(n, ch, oh, ow)          # bitcast: already NCHW order
    else:
        w_mm = w2.astype(in_dtype)
        b_col = b2.reshape(cout, 1)
        out3 = pl.pallas_call(
            _plain_conv_kernel,
            out_shape=jax.ShapeDtypeStruct((n, cout, mimg), x.dtype),
            grid_spec=pltpu.PrefetchScalarGridSpec(
                num_scalar_prefetch=0,
                grid=grid,
                in_specs=[
                    pl.BlockSpec((1, k_dim, tm), lambda b, m: (b, 0, m)),
                    pl.BlockSpec((cout, k_dim), lambda b, m: (0, 0)),
                    pl.BlockSpec((cout, 1), lambda b, m: (0, 0)),
                ],
                out_specs=pl.BlockSpec((1, cout, tm), lambda b, m: (b, 0, m)),
            ),
            compiler_params=cparams,
        )(patches, w_mm, b_col)
        out = out3.reshape(n, cout, oh, ow)
    return out


# ----------------------------------------------------------------------------
# Deterministic parameter init (kaiming_uniform, fan_out, relu; zero bias).
# ----------------------------------------------------------------------------
def init_gen_conv_params(key, input_cnum, output_cnum, kernel_size):
    fan_out = output_cnum * kernel_size * kernel_size
    gain = jnp.sqrt(2.0)                          # relu
    bound = gain * jnp.sqrt(3.0 / fan_out)        # kaiming_uniform
    weight = jax.random.uniform(
        key, (output_cnum, input_cnum, kernel_size, kernel_size),
        dtype=jnp.float32, minval=-bound, maxval=bound)
    bias = jnp.zeros((output_cnum,), dtype=jnp.float32)
    return weight, bias


# ----------------------------------------------------------------------------
# Pure-JAX reference for sanity checks.
# ----------------------------------------------------------------------------
def gen_conv_reference(x, weight, bias, *, kernel_size=3, stride=1,
                       dilation_rate=1, use_activation=True):
    xp = padding_function(x, kernel_size, stride, dilation_rate)
    y = jax.lax.conv_general_dilated(
        xp, weight, window_strides=(stride, stride), padding="VALID",
        rhs_dilation=(dilation_rate, dilation_rate),
        dimension_numbers=("NCHW", "OIHW", "NCHW"))
    y = y + bias.reshape(1, -1, 1, 1)
    cout = weight.shape[0]
    if cout == 3 or not use_activation:
        return y
    a, b = jnp.split(y, 2, axis=1)
    return jax.nn.elu(a) * jax.nn.sigmoid(b)


if __name__ == "__main__":
    key = jax.random.PRNGKey(0)
    k_w, k_x, k_w3 = jax.random.split(key, 3)

    batch, input_cnum, output_cnum = 2, 4, 8
    H = W = 16
    kernel_size = 3

    weight, bias = init_gen_conv_params(k_w, input_cnum, output_cnum, kernel_size)
    x = jax.random.normal(k_x, (batch, input_cnum, H, W), dtype=jnp.float32)

    # --- gated path, f32 matmul operands, k=3 s=1 d=1 ------------------------
    out_f32 = gen_conv_forward(x, weight, bias, kernel_size=3, stride=1,
                               dilation_rate=1, use_activation=True,
                               matmul_dtype=None)
    out_f32 = jax.block_until_ready(out_f32)
    ref = gen_conv_reference(x, weight, bias, kernel_size=3, stride=1,
                             dilation_rate=1, use_activation=True)
    ref = jax.block_until_ready(ref)
    assert out_f32.shape == (batch, output_cnum // 2, H, W), out_f32.shape
    assert jnp.allclose(out_f32, ref, atol=1e-2, rtol=1e-2), "f32 mismatch vs reference"

    # --- gated path, bf16 matmul operands (default) --------------------------
    out_bf16 = gen_conv_forward(x, weight, bias, kernel_size=3, stride=1,
                                dilation_rate=1, use_activation=True,
                                matmul_dtype=jnp.bfloat16)
    out_bf16 = jax.block_until_ready(out_bf16)
    x_r = x.astype(jnp.bfloat16).astype(jnp.float32)
    w_r = weight.astype(jnp.bfloat16).astype(jnp.float32)
    ref_bf16 = gen_conv_reference(x_r, w_r, bias, kernel_size=3, stride=1,
                                  dilation_rate=1, use_activation=True)
    ref_bf16 = jax.block_until_ready(ref_bf16)
    assert out_bf16.shape == (batch, output_cnum // 2, H, W), out_bf16.shape
    assert jnp.allclose(out_bf16, ref_bf16, atol=3e-2, rtol=3e-2), "bf16 mismatch vs reference"

    # --- gated path, stride=2 (exercises asymmetric ZeroPad2d padding) -------
    out_s2 = gen_conv_forward(x, weight, bias, kernel_size=3, stride=2,
                              dilation_rate=1, use_activation=True,
                              matmul_dtype=None)
    out_s2 = jax.block_until_ready(out_s2)
    ref_s2 = gen_conv_reference(x, weight, bias, kernel_size=3, stride=2,
                                dilation_rate=1, use_activation=True)
    ref_s2 = jax.block_until_ready(ref_s2)
    assert out_s2.shape == (batch, output_cnum // 2, H // 2, W // 2), out_s2.shape
    assert jnp.allclose(out_s2, ref_s2, atol=1e-2, rtol=1e-2), "stride-2 mismatch vs reference"

    # --- plain path (output_cnum == 3 disables gating in the module) ---------
    w3, b3 = init_gen_conv_params(k_w3, input_cnum, 3, kernel_size)
    out_p = gen_conv_forward(x, w3, b3, kernel_size=3, stride=1,
                             dilation_rate=1, use_activation=True,
                             matmul_dtype=None)
    out_p = jax.block_until_ready(out_p)
    ref_p = gen_conv_reference(x, w3, b3, kernel_size=3, stride=1,
                               dilation_rate=1, use_activation=True)
    ref_p = jax.block_until_ready(ref_p)
    assert out_p.shape == (batch, 3, H, W), out_p.shape
    assert jnp.allclose(out_p, ref_p, atol=1e-2, rtol=1e-2), "plain-conv mismatch vs reference"

    print("KERNEL_OK")
</pallas_src>

<mosaic_0001>
module attributes {stable_mosaic.version = 11 : i64} {
  func.func @_gated_conv_kernel(%arg0: i32, %arg1: i32, %arg2: memref<1x36x128xf32, #tpu.memory_space<vmem>>, %arg3: memref<16x36xf32, #tpu.memory_space<vmem>>, %arg4: memref<16x1xf32, #tpu.memory_space<vmem>>, %arg5: memref<1x4x128xf32, #tpu.memory_space<vmem>>) attributes {dimension_semantics = [#tpu.dimension_semantics<parallel>, #tpu.dimension_semantics<parallel>], iteration_bounds = array<i64: 2, 2>, scalar_prefetch = 0 : i64, scratch_operands = 0 : i64, tpu.core_type = #tpu.core_type<tc>, window_params = [{transform_indices = @transform_0, window_bounds = array<i64: 1, 36, 128>}, {pipeline_mode = #tpu.pipeline_mode<synchronous>, transform_indices = @transform_1, window_bounds = array<i64: 16, 36>}, {pipeline_mode = #tpu.pipeline_mode<synchronous>, transform_indices = @transform_2, window_bounds = array<i64: 16, 1>}, {transform_indices = @transform_3, window_bounds = array<i64: 1, 4, 128>}]} {
    %c0 = arith.constant 0 : index
    %c0_0 = arith.constant 0 : index
    %c0_1 = arith.constant 0 : index
    %0 = vector.load %arg2[%c0, %c0_0, %c0_1] : memref<1x36x128xf32, #tpu.memory_space<vmem>>, vector<1x36x128xf32>
    %1 = vector.shape_cast %0 : vector<1x36x128xf32> to vector<36x128xf32>
    %c0_2 = arith.constant 0 : index
    %c0_3 = arith.constant 0 : index
    %2 = vector.load %arg3[%c0_2, %c0_3] : memref<16x36xf32, #tpu.memory_space<vmem>>, vector<16x36xf32>
    %cst = arith.constant dense<0.000000e+00> : vector<16x128xf32>
    %3 = tpu.matmul %2, %1, %cst {dimension_numbers = #tpu.dot_dimension_numbers<[1], [0], [0], [1], [0, 0, 1, 1], [], []>} : vector<16x36xf32>, vector<36x128xf32>, vector<16x128xf32> -> vector<16x128xf32>
    %c0_4 = arith.constant 0 : index
    %c0_5 = arith.constant 0 : index
    %4 = vector.load %arg4[%c0_4, %c0_5] : memref<16x1xf32, #tpu.memory_space<vmem>>, vector<16x1xf32>
    %5 = vector.broadcast %4 : vector<16x1xf32> to vector<16x128xf32>
    %6 = arith.addf %3, %5 : vector<16x128xf32>
    %7 = vector.extract_strided_slice %6 {offsets = [0, 0], sizes = [4, 128], strides = [1, 1]} : vector<16x128xf32> to vector<4x128xf32>
    %8 = vector.extract_strided_slice %6 {offsets = [8, 0], sizes = [4, 128], strides = [1, 1]} : vector<16x128xf32> to vector<4x128xf32>
    %cst_6 = arith.constant 0.000000e+00 : f32
    %9 = vector.broadcast %cst_6 : f32 to vector<4x128xf32>
    %10 = arith.cmpf ogt, %7, %9 : vector<4x128xf32>
    %cst_7 = arith.constant 0.000000e+00 : f32
    %11 = vector.broadcast %cst_7 : f32 to vector<4x128xf32>
    %12 = arith.minimumf %7, %11 : vector<4x128xf32>
    %13 = math.exp %12 : vector<4x128xf32>
    %cst_8 = arith.constant 1.000000e+00 : f32
    %14 = vector.broadcast %cst_8 : f32 to vector<4x128xf32>
    %15 = arith.subf %13, %14 : vector<4x128xf32>
    %16 = arith.select %10, %7, %15 : vector<4x128xi1>, vector<4x128xf32>
    %cst_9 = arith.constant 5.000000e-01 : f32
    %17 = vector.broadcast %cst_9 : f32 to vector<4x128xf32>
    %18 = arith.mulf %17, %8 : vector<4x128xf32>
    %19 = math.tanh %18 : vector<4x128xf32>
    %cst_10 = arith.constant 1.000000e+00 : f32
    %20 = vector.broadcast %cst_10 : f32 to vector<4x128xf32>
    %21 = arith.addf %19, %20 : vector<4x128xf32>
    %cst_11 = arith.constant 5.000000e-01 : f32
    %22 = vector.broadcast %cst_11 : f32 to vector<4x128xf32>
    %23 = arith.mulf %22, %21 : vector<4x128xf32>
    %24 = arith.mulf %16, %23 : vector<4x128xf32>
    %c0_12 = arith.constant 0 : index
    %c0_13 = arith.constant 0 : index
    %c0_14 = arith.constant 0 : index
    %25 = vector.load %arg5[%c0_12, %c0_13, %c0_14] : memref<1x4x128xf32, #tpu.memory_space<vmem>>, vector<1x4x128xf32>
    %26 = vector.shape_cast %25 : vector<1x4x128xf32> to vector<4x128xf32>
    %27 = vector.shape_cast %24 : vector<4x128xf32> to vector<1x4x128xf32>
    tpu.vector_store %arg5[%c0_12, %c0_13, %c0_14], %27 {strides = array<i32>} : memref<1x4x128xf32, #tpu.memory_space<vmem>>, vector<1x4x128xf32>,
    return
  }
  func.func @transform_0(%arg0: i32, %arg1: i32) -> (i32, i32, i32) {
    %c0_i32 = arith.constant 0 : i32
    %c0_i32_0 = arith.constant 0 : i32
    return %arg0, %c0_i32, %arg1 : i32, i32, i32
  }
  func.func @transform_1(%arg0: i32, %arg1: i32) -> (i32, i32) {
    %c0_i32 = arith.constant 0 : i32
    %c0_i32_0 = arith.constant 0 : i32
    %c0_i32_1 = arith.constant 0 : i32
    return %c0_i32, %c0_i32_0 : i32, i32
  }
  func.func @transform_2(%arg0: i32, %arg1: i32) -> (i32, i32) {
    %c0_i32 = arith.constant 0 : i32
    %c0_i32_0 = arith.constant 0 : i32
    %c0_i32_1 = arith.constant 0 : i32
    return %c0_i32, %c0_i32_0 : i32, i32
  }
  func.func @transform_3(%arg0: i32, %arg1: i32) -> (i32, i32, i32) {
    %c0_i32 = arith.constant 0 : i32
    %c0_i32_0 = arith.constant 0 : i32
    return %arg0, %c0_i32, %arg1 : i32, i32, i32
  }
}

</mosaic_0001>

<llo_original>
// kernel: tpu_custom_call.1
$region0: #{tpu_custom_call.1}
  #allocation0 [shape = 'u32[]', space=smem, size = 0x4, offset = 0x4, fixed_abs, tag = 'smem constant byte address 0x4 - core index']
  #allocation1 [shape = 'u32[144,128]{1,0:T(1,128)}', space=vmem, size = 0x12000, scoped, tag = 'internal scratch']
  %s0 = inlined_call_operand.vmem [shape: f32[2,36,256], index: 0, kind: input, shape index: {}]
  %s1 = inlined_call_operand.vmem [shape: f32[16,36], index: 1, kind: input, shape index: {}]
  %s2 = inlined_call_operand.vmem [shape: f32[16,1], index: 2, kind: input, shape index: {}]
  %s3 = inlined_call_operand.hbm [shape: f32[2,4,256], index: 3, kind: output, shape index: {}]
  %s4 = sld [smem:[#allocation0]]
  $region83: #{tpu_custom_call.1} parent=0
    _
  %s6 = ssub.s32 1, %s4
  %s7 = scalar_select 0, %s6, %s4
  $region1: #{tpu_custom_call.1} parent=0
    #allocation2 [shape = 'u8[40960]{0}', space=vmem, size = 0xa000, scoped, tag = 'input window, operand 0']
    #allocation3 [shape = 'u8[4096]{0}', space=vmem, size = 0x1000, scoped, tag = 'output window, operand 0']
    #allocation4 [shape = 's32[2]{0}', space=sflag, size = 0x8, scoped, tag = 'scoped memory for tpu_custom_call.1']
    %8 = vsyncpa [#allocation4], 0
    %s9 = scalar_lea.sflag [#allocation4], 1
    %10 = vsyncpa %s9, 0
    loop: start=0, step=1, limit=6
    $region2: #{tpu_custom_call.1} parent=1 // loop_pre_header
      _
    $region3: #{tpu_custom_call.1} parent=1 // loop_header
      %s12 = sphi 0, %s16
      %p13 = scmp.ge.s32.totalorder %s12, 6
      %s19 = sphi 0, %s31
      %s20 = sphi 0, %s27
      %s21 = sphi 0, %s19
      %s22 = sphi 0, %s20
      %s23 = sphi 0, %s21
      %s24 = sphi 0, %s22
      %s36 = sphi 0, %s38
      %s39 = sphi 0, %s36
      %s40 = sphi 0, %s39
      %s56 = sphi 0, %s40
      %s60 = sphi 0, %s60
      %s62 = sphi 0, %s60
      %s63 = sphi 0, %s62
      %s77 = sphi 0, %s63
      %s81 = sphi 0, %s81
      %s83 = sphi 0, %s81
      %s84 = sphi 0, %s83
      %s98 = sphi 0, %s84
      %s106 = sphi 0, %s108
      %s109 = sphi 0, %s106
      %s110 = sphi 0, %s109
      %s126 = sphi 0, %s110
    $region4: #{tpu_custom_call.1} parent=1 // loop_header_branch
      %15 = sbr.rel (%p13) target = $region8
    $region5: #{tpu_custom_call.1} parent=1 // loop_body
      %s17 = ssub.s32 %s12, 1
      %s18 = ssub.s32 %s12, 2
      %s25 = sadd.s32 1, %s20
      %p26 = scmp.ge.s32.totalorder %s25, 2
      %s27 = scalar_select %p26, 0, %s25
      %s28 = sadd.s32 1, %s19
      %s29 = scalar_select %p26, %s28, %s19
      %p30 = scmp.ge.s32.totalorder %s29, 2
      %s31 = scalar_select %p30, 0, %s29
      %s32 = ssub.s32 %s19, %s31
      %s33 = ssub.s32 %s20, %s27
      %s34 = sor.u32 %s32, %s33
      %p35 = scmp.eq.s32.totalorder %s34, 0
      %s37 = sadd.s32 %s36, 1
      %s38 = scalar_select %p35, %s36, %s37
      %p41 = pneg %p35
      %p42 = scmp.eq.s32.totalorder %s12, 3
      %p43 = por %p41, %p42
      %p44 = scmp.ne.s32.totalorder %s36, %s39
      %p45 = scmp.eq.s32.totalorder %s12, 0
      %p46 = por %p44, %p45
      %p47 = scmp.ne.s32.totalorder %s36, %s39
      %p48 = scmp.eq.s32.totalorder %s17, 3
      %p49 = por %p47, %p48
      %p50 = scmp.ne.s32.totalorder %s39, %s40
      %p51 = scmp.eq.s32.totalorder %s17, 0
      %p52 = por %p50, %p51
      %p53 = scmp.ne.s32.totalorder %s39, %s40
      %p54 = scmp.eq.s32.totalorder %s18, 3
      %p55 = por %p53, %p54
      %p57 = scmp.ne.s32.totalorder %s40, %s56
      %p58 = scmp.eq.s32.totalorder %s18, 0
      %p59 = por %p57, %p58
      %s61 = sadd.s32 %s60, 1
      %p64 = scmp.eq.s32.totalorder %s12, 3
      %p65 = scmp.ne.s32.totalorder %s60, %s62
      %p66 = scmp.eq.s32.totalorder %s12, 0
      %p67 = por %p65, %p66
      %p68 = scmp.ne.s32.totalorder %s60, %s62
      %p69 = scmp.eq.s32.totalorder %s17, 3
      %p70 = por %p68, %p69
      %p71 = scmp.ne.s32.totalorder %s62, %s63
      %p72 = scmp.eq.s32.totalorder %s17, 0
      %p73 = por %p71, %p72
      %p74 = scmp.ne.s32.totalorder %s62, %s63
      %p75 = scmp.eq.s32.totalorder %s18, 3
      %p76 = por %p74, %p75
      %p78 = scmp.ne.s32.totalorder %s63, %s77
      %p79 = scmp.eq.s32.totalorder %s18, 0
      %p80 = por %p78, %p79
      %s82 = sadd.s32 %s81, 1
      %p85 = scmp.eq.s32.totalorder %s12, 3
      %p86 = scmp.ne.s32.totalorder %s81, %s83
      %p87 = scmp.eq.s32.totalorder %s12, 0
      %p88 = por %p86, %p87
      %p89 = scmp.ne.s32.totalorder %s81, %s83
      %p90 = scmp.eq.s32.totalorder %s17, 3
      %p91 = por %p89, %p90
      %p92 = scmp.ne.s32.totalorder %s83, %s84
      %p93 = scmp.eq.s32.totalorder %s17, 0
      %p94 = por %p92, %p93
      %p95 = scmp.ne.s32.totalorder %s83, %s84
      %p96 = scmp.eq.s32.totalorder %s18, 3
      %p97 = por %p95, %p96
      %p99 = scmp.ne.s32.totalorder %s84, %s98
      %p100 = scmp.eq.s32.totalorder %s18, 0
      %p101 = por %p99, %p100
      %s102 = ssub.s32 %s19, %s31
      %s103 = ssub.s32 %s20, %s27
      %s104 = sor.u32 %s102, %s103
      %p105 = scmp.eq.s32.totalorder %s104, 0
      %s107 = sadd.s32 %s106, 1
      %s108 = scalar_select %p105, %s106, %s107
      %p111 = pneg %p105
      %p112 = scmp.eq.s32.totalorder %s12, 3
      %p113 = por %p111, %p112
      %p114 = scmp.ne.s32.totalorder %s106, %s109
      %p115 = scmp.eq.s32.totalorder %s12, 0
      %p116 = por %p114, %p115
      %p117 = scmp.ne.s32.totalorder %s106, %s109
      %p118 = scmp.eq.s32.totalorder %s17, 3
      %p119 = por %p117, %p118
      %p120 = scmp.ne.s32.totalorder %s109, %s110
      %p121 = scmp.eq.s32.totalorder %s17, 0
      %p122 = por %p120, %p121
      %p123 = scmp.ne.s32.totalorder %s109, %s110
      %p124 = scmp.eq.s32.totalorder %s18, 3
      %p125 = por %p123, %p124
      %p127 = scmp.ne.s32.totalorder %s110, %s126
      %p128 = scmp.eq.s32.totalorder %s18, 0
      %p129 = por %p127, %p128
      %p130 = scmp.le.s32.totalorder 1, %s12
      %p131 = scmp.lt.s32.totalorder %s12, 5
      %p132 = pnand %p130, %p131
      %p133 = pneg %p132
      // Predicated region
      $region9: #{tpu_custom_call.1} parent=5 // pred_check
        _
      $region10: #{tpu_custom_call.1} parent=5 // pred_check_branch
        %135 = sbr.rel (%p132) target = $region12
      $region11: #{tpu_custom_call.1} parent=5 // pred_region
        %s136 = ssub.s32 %s12, 1
        // Predicated region
        $region13: #{tpu_custom_call.1} parent=11 // pred_check
          %p137 = pneg %p73
        $region14: #{tpu_custom_call.1} parent=11 // pred_check_branch
          %139 = sbr.rel (%p137) target = $region16
        $region15: #{tpu_custom_call.1} parent=11 // pred_region
          _
        $region16: #{tpu_custom_call.1} parent=11 // pred_fallthru
          _
        // Predicated region
        $region17: #{tpu_custom_call.1} parent=11 // pred_check
          %p140 = pneg %p94
        $region18: #{tpu_custom_call.1} parent=11 // pred_check_branch
          %142 = sbr.rel (%p140) target = $region20
        $region19: #{tpu_custom_call.1} parent=11 // pred_region
          _
        $region20: #{tpu_custom_call.1} parent=11 // pred_fallthru
          _
      $region12: #{tpu_custom_call.1} parent=5 // pred_fallthru
        _
      %p143 = scmp.lt.s32.totalorder %s12, 4
      // Predicated region
      $region21: #{tpu_custom_call.1} parent=5 // pred_check
        %p144 = pneg %p143
      $region22: #{tpu_custom_call.1} parent=5 // pred_check_branch
        %146 = sbr.rel (%p144) target = $region24
      $region23: #{tpu_custom_call.1} parent=5 // pred_region
        // Predicated region
        $region25: #{tpu_custom_call.1} parent=23 // pred_check
          %p147 = pneg %p46
        $region26: #{tpu_custom_call.1} parent=23 // pred_check_branch
          %149 = sbr.rel (%p147) target = $region28
        $region27: #{tpu_custom_call.1} parent=23 // pred_region
          %s150 = sand.u32 %s36, 1
          %s151 = sand.u32 %s36, 1
          %s152 = smul.addr %s151, 40
          %s153 = scalar_lea.vmem [#allocation2], %s152
          %s154 = smul.addr %s19, 10
          %s155 = sadd.s32 %s20, %s154
          %s156 = smul.addr %s155, 8
          %s157 = scalar_lea.vmem %s0, %s156
          // Predicated region
          $region29: #{tpu_custom_call.1} parent=27 // pred_check
            _
          $region30: #{tpu_custom_call.1} parent=27 // pred_check_branch
            %159 = sbr.rel (0) target = $region32
          $region31: #{tpu_custom_call.1} parent=27 // pred_region
            // Predicated region
            $region33: #{tpu_custom_call.1} parent=31 // pred_check
              _
            $region34: #{tpu_custom_call.1} parent=31 // pred_check_branch
              %161 = sbr.rel (0) target = $region36
            $region35: #{tpu_custom_call.1} parent=31 // pred_region
              // Predicated region
              $region48: #{tpu_custom_call.1} parent=35 // pred_check
                _
              $region49: #{tpu_custom_call.1} parent=35 // pred_check_branch
                %184 = sbr.rel (0) target = $region51
              $region50: #{tpu_custom_call.1} parent=35 // pred_region
                loop: start=0, step=1, limit=1
                $region52: #{tpu_custom_call.1} parent=50 // loop_pre_header
                  _
                $region53: #{tpu_custom_call.1} parent=50 // loop_header
                  %s186 = sphi 0, %s190
                  %p187 = scmp.ge.s32.totalorder %s186, 1
                  %s191 = sphi %s157, %s157
                  %s192 = sphi %s153, %s153
                $region54: #{tpu_custom_call.1} parent=50 // loop_header_branch
                  %189 = sbr.rel (%p187) target = $region58
                $region55: #{tpu_custom_call.1} parent=50 // loop_body
                  %v193 = vld [vmem:[%s191] sm:$0xff]
                  %194 = vst [vmem:[%s192] sm:$0xff] %v193
                  %v195 = vld [vmem:[%s191 + $0x10] sm:$0xff]
                  %196 = vst [vmem:[%s192 + $0x8] sm:$0xff] %v195
                  %v197 = vld [vmem:[%s191 + $0x20] sm:$0xff]
                  %198 = vst [vmem:[%s192 + $0x10] sm:$0xff] %v197
                  %v199 = vld [vmem:[%s191 + $0x30] sm:$0xff]
                  %200 = vst [vmem:[%s192 + $0x18] sm:$0xff] %v199
                  %v201 = vld [vmem:[%s191 + $0x40] sm:$0xff]
                  %202 = vst [vmem:[%s192 + $0x20] sm:$0xff] %v201
                $region56: #{tpu_custom_call.1} parent=50 // loop_footer
                  %s190 = sadd.s32 1, %s186
                $region57: #{tpu_custom_call.1} parent=50 // loop_footer_branch
                  %185 = sbr.rel target = $region53
                $region58: #{tpu_custom_call.1} parent=50 // loop_exit
                  _
              $region51: #{tpu_custom_call.1} parent=35 // pred_fallthru
                _
              // Predicated region
              $region59: #{tpu_custom_call.1} parent=35 // pred_check
                _
              $region60: #{tpu_custom_call.1} parent=35 // pred_check_branch
                %204 = sbr.rel target = $region62
              $region61: #{tpu_custom_call.1} parent=35 // pred_region
                _
              $region62: #{tpu_custom_call.1} parent=35 // pred_fallthru
                _
            $region36: #{tpu_custom_call.1} parent=31 // pred_fallthru
              _
            // Predicated region
            $region37: #{tpu_custom_call.1} parent=31 // pred_check
              _
            $region38: #{tpu_custom_call.1} parent=31 // pred_check_branch
              %163 = sbr.rel target = $region40
            $region39: #{tpu_custom_call.1} parent=31 // pred_region
              loop: start=0, step=1, limit=1
              $region41: #{tpu_custom_call.1} parent=39 // loop_pre_header
                _
              $region42: #{tpu_custom_call.1} parent=39 // loop_header
                %s166 = sphi 0, %s170
                %p167 = scmp.ge.s32.totalorder %s166, 1
                %s171 = sphi %s157, %s157
                %s172 = sphi %s153, %s153
              $region43: #{tpu_custom_call.1} parent=39 // loop_header_branch
                %169 = sbr.rel (%p167) target = $region47
              $region44: #{tpu_custom_call.1} parent=39 // loop_body
                %v173 = vld [vmem:[%s171] sm:$0xff]
                %174 = vst [vmem:[%s172] sm:$0xff] %v173
                %v175 = vld [vmem:[%s171 + $0x10] sm:$0xff]
                %176 = vst [vmem:[%s172 + $0x8] sm:$0xff] %v175
                %v177 = vld [vmem:[%s171 + $0x20] sm:$0xff]
                %178 = vst [vmem:[%s172 + $0x10] sm:$0xff] %v177
                %v179 = vld [vmem:[%s171 + $0x30] sm:$0xff]
                %180 = vst [vmem:[%s172 + $0x18] sm:$0xff] %v179
                %v181 = vld [vmem:[%s171 + $0x40] sm:$0xff]
                %182 = vst [vmem:[%s172 + $0x20] sm:$0xff] %v181
              $region45: #{tpu_custom_call.1} parent=39 // loop_footer
                %s170 = sadd.s32 1, %s166
              $region46: #{tpu_custom_call.1} parent=39 // loop_footer_branch
                %165 = sbr.rel target = $region42
              $region47: #{tpu_custom_call.1} parent=39 // loop_exit
                _
            $region40: #{tpu_custom_call.1} parent=31 // pred_fallthru
              _
          $region32: #{tpu_custom_call.1} parent=27 // pred_fallthru
            _
          %205 = vnop
        $region28: #{tpu_custom_call.1} parent=23 // pred_fallthru
          _
      $region24: #{tpu_custom_call.1} parent=5 // pred_fallthru
        _
      %p206 = scmp.le.s32.totalorder 1, %s12
      %p207 = scmp.lt.s32.totalorder %s12, 5
      %p208 = pnand %p206, %p207
      %p209 = pneg %p208
      // Predicated region
      $region63: #{tpu_custom_call.1} parent=5 // pred_check
        _
      $region64: #{tpu_custom_call.1} parent=5 // pred_check_branch
        %211 = sbr.rel (%p208) target = $region66
      $region65: #{tpu_custom_call.1} parent=5 // pred_region
        %s212 = ssub.s32 %s12, 1
        %s213 = sand.u32 %s39, 1
        %s214 = sand.u32 %s39, 1
        %s215 = smul.addr %s214, 40
        %s216 = scalar_lea.vmem [#allocation2], %s215
        // Predicated region
        $region67: #{tpu_custom_call.1} parent=65 // pred_check
          %p217 = pneg %p52
        $region68: #{tpu_custom_call.1} parent=65 // pred_check_branch
          %219 = sbr.rel (%p217) target = $region70
        $region69: #{tpu_custom_call.1} parent=65 // pred_region
          _
        $region70: #{tpu_custom_call.1} parent=65 // pred_fallthru
          _
        %s220 = sand.u32 %s39, 1
        %s221 = sand.u32 %s39, 1
        %s222 = smul.addr %s221, 40
        %s223 = scalar_lea.vmem [#allocation2], %s222
        %p224 = pneg %p52
        %p225 = pneg %p49
        %p226 = pneg %p73
        %p227 = pneg %p70
        %p228 = pneg %p94
        %p229 = pneg %p91
        %p230 = pneg %p122
        %p231 = pneg %p119
        %s232 = sand.u32 %s109, 1
        %s233 = scalar_lea.sflag [#allocation4], %s232
        %s234 = sand.u32 %s109, 1
        %s235 = smul.addr %s234, 4
        %s236 = scalar_lea.vmem [#allocation3], %s235
        %v237 = vld [vmem:[%s216] sm:$0xff]
        %v238 = vld [vmem:[%s216 + $0x8] sm:$0xff]
        %v239 = vld [vmem:[%s216 + $0x10] sm:$0xff]
        %v240 = vld [vmem:[%s216 + $0x18] sm:$0xff]
        %v241 = vld [vmem:[%s216 + $0x20] sm:$0xf]
        %v242 = vld [vmem:[%s1] sm:$0xff]
        %v243 = vld [vmem:[%s1 + $0x8] sm:$0xff]
        %v244 = vld [vmem:[%s2] sm:$0xff]
        %v245 = vld [vmem:[%s2 + $0x8] sm:$0xff]
        %247 = vset.pattern.permute.xlu0 0
        %248 = vperm.xlu0 %247, %v244
        %v249 = vpop.permute.xlu0 %248
        %252 = vset.pattern.permute.xlu0 0
        %253 = vperm.xlu0 %252, %v245
        %v254 = vpop.permute.xlu0 %253
        %vm256 = vcmask 293888
        %v258 = vsel %vm256, %v242, 0
        %v261 = vsel %vm256, %v243, 0
        %vm263 = vcmask 1043456
        %v265 = vsel %vm263, %v241, 0
        %267 = vmatprep.subr.mxu0 0.0
        %268 = vmatpush1.msra.mxu0 %v237
        %269 = vmatprep.subr.mxu0 0.0
        %270 = vmatpush1.msra.mxu0 %v238
        %271 = vmatprep.subr.mxu0 0.0
        %272 = vmatpush1.msra.mxu0 %v239
        %273 = vmatprep.subr.mxu0 0.0
        %274 = vmatpush1.msra.mxu0 %v240
        %275 = vmatprep.subr.mxu0 0.0
        %276 = vmatpush1.msra.mxu0 %v265
        %277 = vmatprep.subr.mxu0 0.0
        %278 = vmatpush1.msra.mxu0 0.0
        %279 = vmatprep.subr.mxu0 0.0
        %280 = vmatpush1.msra.mxu0 0.0
        %281 = vmatprep.subr.mxu0 0.0
        %282 = vmatpush1.msra.mxu0 0.0
        %283 = vmatprep.subr.mxu0 0.0
        %284 = vmatpush1.msra.mxu0 0.0
        %285 = vmatprep.subr.mxu0 0.0
        %286 = vmatpush1.msra.mxu0 0.0
        %287 = vmatprep.subr.mxu0 0.0
        %288 = vmatpush1.msra.mxu0 0.0
        %289 = vmatprep.subr.mxu0 0.0
        %290 = vmatpush1.msra.mxu0 0.0
        %291 = vmatprep.subr.mxu0 0.0
        %292 = vmatpush1.msra.mxu0 0.0
        %293 = vmatprep.subr.mxu0 0.0
        %294 = vmatpush1.msra.mxu0 0.0
        %295 = vmatprep.subr.mxu0 0.0
        %296 = vmatpush1.msra.mxu0 0.0
        %297 = vmatprep.subr.mxu0 0.0
        %298 = vmatpush1.msra.mxu0 0.0
        %299 = vmatprep.subr.mxu0 0.0
        %300 = vmatpush1.msra.mxu0 0.0
        %301 = vmatprep.subr.mxu0 0.0
        %302 = vmatpush1.msra.mxu0 0.0
        %303 = vmatprep.subr.mxu0 0.0
        %304 = vmatpush1.msra.mxu0 0.0
        %305 = vmatprep.subr.mxu0 0.0
        %306 = vmatpush1.msra.mxu0 0.0
        %307 = vmatprep.subr.mxu0 0.0
        %308 = vmatpush1.msra.mxu0 0.0
        %309 = vmatprep.subr.mxu0 0.0
        %310 = vmatpush1.msra.mxu0 0.0
        %311 = vmatprep.subr.mxu0 0.0
        %312 = vmatpush1.msra.mxu0 0.0
        %313 = vmatprep.subr.mxu0 0.0
        %314 = vmatpush1.msra.mxu0 0.0
        %315 = vmatprep.subr.mxu0 0.0
        %316 = vmatpush1.msra.mxu0 0.0
        %317 = vmatprep.subr.mxu0 0.0
        %318 = vmatpush1.msra.mxu0 0.0
        %319 = vmatprep.subr.mxu0 0.0
        %320 = vmatpush1.msra.mxu0 0.0
        %321 = vmatprep.subr.mxu0 0.0
        %322 = vmatpush1.msra.mxu0 0.0
        %323 = vmatprep.subr.mxu0 0.0
        %324 = vmatpush1.msra.mxu0 0.0
        %325 = vmatprep.subr.mxu0 0.0
        %326 = vmatpush1.msra.mxu0 0.0
        %327 = vmatprep.subr.mxu0 0.0
        %328 = vmatpush1.msra.mxu0 0.0
        %329 = vmatprep.subr.mxu0 0.0
        %330 = vmatpush1.msra.mxu0 0.0
        %331 = vmatprep.mubr.f32.mxu0 0.0
        %332 = vmatmul.mubr.f32.gmra.mrb[0].mxu0 %v258
        %v333 = vpop.f32.mrb[0].mxu0
        %v334 = vadd.f32 %v249, %v333
        %v335 = vpop.f32.mrb[0].mxu0
        %336 = vmatprep.mubr.f32.mxu0 0.0
        %337 = vmatmul.mubr.f32.gmra.mrb[0].mxu0 %v261
        %v338 = vpop.f32.mrb[0].mxu0
        %v339 = vadd.f32 %v254, %v338
        %v340 = vpop.f32.mrb[0].mxu0
        %341 = vdwg.mxu0
        %vm342 = vcmp.gt.f32.partialorder %v334, 0.0
        %v343 = vmin.f32 %v334, 0.0
        %v344 = vmul.f32 %v343, 1.442695
        %v345 = vpow.pop %v344
        %v346 = vsub.f32 %v345, 1.0
        %v347 = vsel %vm342, %v334, %v346
        %v348 = vmul.f32 %v339, 0.5
        %v349 = vtanh.pop %v348
        %v350 = vadd.f32 %v349, 1.0
        %v351 = vmul.f32 %v350, 0.5
        %v352 = vmul.f32 %v347, %v351
        %353 = vst [vmem:[%s236] sm:$0xf] %v352
        %s354 = sand.u32 %s109, 1
        %s355 = scalar_lea.sflag [#allocation4], %s354
        %s356 = sand.u32 %s109, 1
        %s357 = smul.addr %s356, 4
        %s358 = scalar_lea.vmem [#allocation3], %s357
        // Predicated region
        $region71: #{tpu_custom_call.1} parent=65 // pred_check
          %p359 = pneg %p119
        $region72: #{tpu_custom_call.1} parent=65 // pred_check_branch
          %361 = sbr.rel (%p359) target = $region74
        $region73: #{tpu_custom_call.1} parent=65 // pred_region
          %s363 = ssub.s32 64, 64
          %364 = vsyncadd %s355, %s363
          %s365 = smul.addr %s21, 2
          %s366 = sadd.s32 %s22, %s365
          %s367 = smul.addr %s366, 64
          %s368 = scalar_lea.hbm %s3, %s367
          %s370 = sshll.u32 %s358, 4
          %s371 = int_to_ptr.vmem [resolvable:$true] %s370
          %373 = dma.vmem_to_hbm [thread:$0]  %s371, 64, %s368, %s355
        $region74: #{tpu_custom_call.1} parent=65 // pred_fallthru
          _
      $region66: #{tpu_custom_call.1} parent=5 // pred_fallthru
        _
      %p374 = scmp.le.s32.totalorder 2, %s12
      // Predicated region
      $region75: #{tpu_custom_call.1} parent=5 // pred_check
        %p375 = pneg %p374
      $region76: #{tpu_custom_call.1} parent=5 // pred_check_branch
        %377 = sbr.rel (%p375) target = $region78
      $region77: #{tpu_custom_call.1} parent=5 // pred_region
        %s378 = ssub.s32 %s12, 2
        // Predicated region
        $region79: #{tpu_custom_call.1} parent=77 // pred_check
          %p379 = pneg %p125
        $region80: #{tpu_custom_call.1} parent=77 // pred_check_branch
          %381 = sbr.rel (%p379) target = $region82
        $region81: #{tpu_custom_call.1} parent=77 // pred_region
          %s382 = sand.u32 %s110, 1
          %s383 = scalar_lea.sflag [#allocation4], %s382
          %s384 = sand.u32 %s110, 1
          %s385 = smul.addr %s384, 4
          %s386 = scalar_lea.vmem [#allocation3], %s385
          %387 = dma.done %s383, 64
        $region82: #{tpu_custom_call.1} parent=77 // pred_fallthru
          _
      $region78: #{tpu_custom_call.1} parent=5 // pred_fallthru
        _
    $region6: #{tpu_custom_call.1} parent=1 // loop_footer
      %s16 = sadd.s32 1, %s12
    $region7: #{tpu_custom_call.1} parent=1 // loop_footer_branch
      %11 = sbr.rel target = $region3
    $region8: #{tpu_custom_call.1} parent=1 // loop_exit
      _
    %388 = vsyncpa [#allocation4], 1
    %s389 = scalar_lea.sflag [#allocation4], 1
    %390 = vsyncpa %s389, 1

</llo_original>
